<compile_context>
chip_gen: v6e
topology: v6e:2x2x1
jax: 0.10.0
libtpu: 0.0.40
codegen_flags: <defaults>
</compile_context>

<pallas_src>
import jax
import jax.numpy as jnp
from jax.experimental import pallas as pl
from jax.experimental.pallas import tpu as pltpu

n_embed = 32
_LANE = 128
_SUBLANE = 8


def _round_up(x, m):
    return ((x + m - 1) // m) * m


def _ffwd_kernel(x_ref, w_ref, b_ref, o_ref):
    # x_ref: (tm, Cp), w_ref: (Cp, Cp), b_ref: (1, Cp), o_ref: (tm, Cp)
    y = jnp.dot(x_ref[...], w_ref[...], preferred_element_type=jnp.float32)
    y = y + b_ref[...].astype(jnp.float32)
    o_ref[...] = jnp.maximum(y, 0.0).astype(o_ref.dtype)


class FeedForward:
    """y = relu(x @ weight + bias); weight is (in, out), bias is (out,).

    Weight/bias packing is done once at construction (hoisted out of the
    per-call path per perf review).
    """

    def __init__(self, weight, bias, *, row_tile=4096, compute_dtype=None):
        C_in, C_out = weight.shape
        assert C_in == C_out, "FeedForward is square (n_embed -> n_embed)"
        self.C = C_in
        self.compute_dtype = compute_dtype

        # Lane packing: fold P rows of x into one 128-wide row when C < 128 so
        # every load/store uses all 128 lanes and the matmul is a full-width
        # MXU pass instead of a C-wide sliver.
        if self.C < _LANE and _LANE % self.C == 0:
            self.P = _LANE // self.C
        else:
            self.P = 1
        self.Cp = self.C * self.P

        if compute_dtype is not None:
            weight = weight.astype(compute_dtype)
            bias = bias.astype(compute_dtype)

        if self.P > 1:
            # kron(I_P, W) applies W independently to each C-wide chunk of a
            # packed row -> exactly the original per-row Linear.
            self.w_p = jnp.kron(jnp.eye(self.P, dtype=weight.dtype), weight)  # (Cp, Cp)
            self.b_p = jnp.tile(bias, self.P).reshape(1, self.Cp)
        else:
            self.w_p = weight
            self.b_p = bias.reshape(1, self.Cp)

        self.row_tile = max(_SUBLANE, _round_up(int(row_tile), _SUBLANE))

    def __call__(self, x):
        B, T, C = x.shape
        assert C == self.C
        P, Cp = self.P, self.Cp
        M = B * T

        if self.compute_dtype is not None and x.dtype != self.compute_dtype:
            x = x.astype(self.compute_dtype)

        x2d = x.reshape(M, C)
        # Only pad M to a multiple of P (at most P-1 rows; 0 when B*T % P == 0).
        # We do NOT pad up to the row tile -- the ragged last grid block
        # handles that (out-of-range writes are discarded by Pallas).
        M_pad = _round_up(M, P)
        if M_pad != M:
            x2d = jnp.pad(x2d, ((0, M_pad - M), (0, 0)))
        Mq = M_pad // P
        xp = x2d.reshape(Mq, Cp)

        # Tile over the packed-row dim.  Prefer >= ~4 grid steps (pipelining /
        # both TCs on v7x), tile size multiple of 8 sublanes, capped by
        # row_tile so double-buffered x+out tiles stay well inside VMEM.
        if Mq < 2 * _SUBLANE:
            # Tiny problem: block == full dim is the only legal sublane tiling.
            tm, grid_m = Mq, 1
        else:
            tm = min(self.row_tile,
                     max(_SUBLANE, _round_up(pl.cdiv(Mq, 4), _SUBLANE)))
            grid_m = pl.cdiv(Mq, tm)

        x_bytes = jnp.dtype(xp.dtype).itemsize
        w_bytes = jnp.dtype(self.w_p.dtype).itemsize
        cost = pl.CostEstimate(
            flops=2 * Mq * Cp * Cp,
            transcendentals=0,
            bytes_accessed=(Mq * Cp * x_bytes        # x read
                            + Cp * Cp * w_bytes      # weight read
                            + Cp * w_bytes           # bias read
                            + Mq * Cp * x_bytes),    # out write
        )

        # Double-buffered x + out tiles, resident weight/bias, plus margin.
        vmem_needed = 4 * tm * Cp * x_bytes + (Cp * Cp + Cp) * w_bytes
        vmem_limit = min(vmem_needed + (24 << 20), 56 << 20)

        out = pl.pallas_call(
            _ffwd_kernel,
            out_shape=jax.ShapeDtypeStruct((Mq, Cp), xp.dtype),
            grid=(grid_m,),
            in_specs=[
                pl.BlockSpec((tm, Cp), lambda i: (i, 0)),   # x tile, pipelined over M
                pl.BlockSpec((Cp, Cp), lambda i: (0, 0)),   # weight, VMEM-resident
                pl.BlockSpec((1, Cp), lambda i: (0, 0)),    # bias, VMEM-resident
            ],
            out_specs=pl.BlockSpec((tm, Cp), lambda i: (i, 0)),
            compiler_params=pltpu.CompilerParams(
                dimension_semantics=("parallel",),
                vmem_limit_bytes=vmem_limit,
            ),
            cost_estimate=cost,
        )(xp, self.w_p, self.b_p)

        y = out.reshape(M_pad, C)
        if M_pad != M:
            y = y[:M]
        return y.reshape(B, T, C)


if __name__ == "__main__":
    key = jax.random.PRNGKey(0)
    kx, kw, kb, kx2 = jax.random.split(key, 4)

    B, T, C = 2, 8, n_embed

    # Deterministic param init (same uniform range as torch.nn.Linear default).
    bound = 1.0 / float(jnp.sqrt(jnp.float32(C)))
    # torch Linear weight is (out, in); kernel wants (in, out).
    w_t = jax.random.uniform(kw, (C, C), minval=-bound, maxval=bound, dtype=jnp.float32)
    weight = w_t.T
    bias = jax.random.uniform(kb, (C,), minval=-bound, maxval=bound, dtype=jnp.float32)

    def ref(xv):
        return jnp.maximum(xv @ weight + bias, 0.0)

    ffwd = FeedForward(weight, bias)

    # 1) Module-spec shape (single-block path).
    x = jax.random.normal(kx, (B, T, C), dtype=jnp.float32)
    y = ffwd(x)
    jax.block_until_ready(y)
    assert jnp.allclose(y, ref(x), atol=1e-4, rtol=1e-4), "mismatch vs reference (f32 small)"

    # 2) M not a multiple of P and multi-step grid with a ragged last block.
    x2 = jax.random.normal(kx2, (3, 23, C), dtype=jnp.float32)
    y2 = ffwd(x2)
    jax.block_until_ready(y2)
    assert jnp.allclose(y2, ref(x2), atol=1e-4, rtol=1e-4), "mismatch vs reference (f32 ragged)"

    # 3) bf16 compute path (v6e/v7x bandwidth optimization).
    ffwd_bf16 = FeedForward(weight, bias, compute_dtype=jnp.bfloat16)
    y3 = ffwd_bf16(x2)
    jax.block_until_ready(y3)
    x2_bf = x2.astype(jnp.bfloat16).reshape(-1, C)
    ref_bf = jnp.maximum(
        jnp.dot(x2_bf, weight.astype(jnp.bfloat16), preferred_element_type=jnp.float32)
        + bias.astype(jnp.bfloat16).astype(jnp.float32),
        0.0,
    ).reshape(x2.shape)
    assert jnp.allclose(y3.astype(jnp.float32), ref_bf, atol=2e-2, rtol=2e-2), \
        "mismatch vs reference (bf16)"

    print("KERNEL_OK")
</pallas_src>

<mosaic_0001>
module attributes {stable_mosaic.version = 11 : i64} {
  func.func @_ffwd_kernel(%arg0: i32, %arg1: memref<4x128xf32, #tpu.memory_space<vmem>>, %arg2: memref<128x128xf32, #tpu.memory_space<vmem>>, %arg3: memref<1x128xf32, #tpu.memory_space<vmem>>, %arg4: memref<4x128xf32, #tpu.memory_space<vmem>>) attributes {dimension_semantics = [#tpu.dimension_semantics<parallel>], iteration_bounds = array<i64: 1>, scalar_prefetch = 0 : i64, scratch_operands = 0 : i64, tpu.core_type = #tpu.core_type<tc>, window_params = [{transform_indices = @transform_0, window_bounds = array<i64: 4, 128>}, {pipeline_mode = #tpu.pipeline_mode<synchronous>, transform_indices = @transform_1, window_bounds = array<i64: 128, 128>}, {pipeline_mode = #tpu.pipeline_mode<synchronous>, transform_indices = @transform_2, window_bounds = array<i64: 1, 128>}, {transform_indices = @transform_3, window_bounds = array<i64: 4, 128>}]} {
    %c0 = arith.constant 0 : index
    %c0_0 = arith.constant 0 : index
    %0 = vector.load %arg1[%c0, %c0_0] : memref<4x128xf32, #tpu.memory_space<vmem>>, vector<4x128xf32>
    %c0_1 = arith.constant 0 : index
    %c0_2 = arith.constant 0 : index
    %1 = vector.load %arg2[%c0_1, %c0_2] : memref<128x128xf32, #tpu.memory_space<vmem>>, vector<128x128xf32>
    %cst = arith.constant dense<0.000000e+00> : vector<4x128xf32>
    %2 = tpu.matmul %0, %1, %cst {dimension_numbers = #tpu.dot_dimension_numbers<[1], [0], [0], [1], [0, 0, 1, 1], [], []>} : vector<4x128xf32>, vector<128x128xf32>, vector<4x128xf32> -> vector<4x128xf32>
    %c0_3 = arith.constant 0 : index
    %c0_4 = arith.constant 0 : index
    %3 = vector.load %arg3[%c0_3, %c0_4] : memref<1x128xf32, #tpu.memory_space<vmem>>, vector<1x128xf32>
    %4 = vector.broadcast %3 : vector<1x128xf32> to vector<4x128xf32>
    %5 = arith.addf %2, %4 : vector<4x128xf32>
    %cst_5 = arith.constant 0.000000e+00 : f32
    %6 = vector.broadcast %cst_5 : f32 to vector<4x128xf32>
    %7 = arith.maximumf %5, %6 : vector<4x128xf32>
    %c0_6 = arith.constant 0 : index
    %c0_7 = arith.constant 0 : index
    %8 = vector.load %arg4[%c0_6, %c0_7] : memref<4x128xf32, #tpu.memory_space<vmem>>, vector<4x128xf32>
    tpu.vector_store %arg4[%c0_6, %c0_7], %7 {strides = array<i32>} : memref<4x128xf32, #tpu.memory_space<vmem>>, vector<4x128xf32>,
    return
  }
  func.func @transform_0(%arg0: i32) -> (i32, i32) {
    %c0_i32 = arith.constant 0 : i32
    %c0_i32_0 = arith.constant 0 : i32
    return %arg0, %c0_i32 : i32, i32
  }
  func.func @transform_1(%arg0: i32) -> (i32, i32) {
    %c0_i32 = arith.constant 0 : i32
    %c0_i32_0 = arith.constant 0 : i32
    %c0_i32_1 = arith.constant 0 : i32
    return %c0_i32, %c0_i32_0 : i32, i32
  }
  func.func @transform_2(%arg0: i32) -> (i32, i32) {
    %c0_i32 = arith.constant 0 : i32
    %c0_i32_0 = arith.constant 0 : i32
    %c0_i32_1 = arith.constant 0 : i32
    return %c0_i32, %c0_i32_0 : i32, i32
  }
  func.func @transform_3(%arg0: i32) -> (i32, i32) {
    %c0_i32 = arith.constant 0 : i32
    %c0_i32_0 = arith.constant 0 : i32
    return %arg0, %c0_i32 : i32, i32
  }
}

</mosaic_0001>

<llo_original>
// kernel: tpu_custom_call.1
$region0: #{tpu_custom_call.1}
  #allocation0 [shape = 'u32[]', space=smem, size = 0x4, offset = 0x4, fixed_abs, tag = 'smem constant byte address 0x4 - core index']
  #allocation1 [shape = 'u32[144,128]{1,0:T(1,128)}', space=vmem, size = 0x12000, scoped, tag = 'internal scratch']
  %s0 = inlined_call_operand.hbm [shape: f32[4,128], index: 0, kind: input, shape index: {}]
  %s1 = inlined_call_operand.hbm [shape: f32[128,128], index: 1, kind: input, shape index: {}]
  %s2 = inlined_call_operand.vmem [shape: f32[1,128], index: 2, kind: input, shape index: {}]
  %s3 = inlined_call_operand.hbm [shape: f32[4,128], index: 3, kind: output, shape index: {}]
  %s4 = sld [smem:[#allocation0]]
  $region30: #{tpu_custom_call.1} parent=0
    _
  %s6 = ssub.s32 1, %s4
  %s7 = scalar_select 0, %s6, %s4
  $region1: #{tpu_custom_call.1} parent=0
    #allocation2 [shape = 'u8[2048]{0}', space=vmem, size = 0x800, scoped, tag = 'input window, operand 0, single buffered']
    #allocation3 [shape = 's32[1]{0}', space=sflag, size = 0x4, scoped, tag = 'scoped memory for tpu_custom_call.1']
    #allocation4 [shape = 's32[1]{0}', space=sflag, size = 0x4, scoped, tag = 'scoped memory for tpu_custom_call.1']
    #allocation5 [shape = 'u8[65536]{0}', space=vmem, size = 0x10000, scoped, tag = 'input window, operand 1, single buffered']
    #allocation6 [shape = 's32[1]{0}', space=sflag, size = 0x4, scoped, tag = 'scoped memory for tpu_custom_call.1']
    #allocation7 [shape = 'u8[2048]{0}', space=vmem, size = 0x800, scoped, tag = 'output window, operand 0, single buffered']
    %8 = vsyncpa [#allocation3], 0
    %9 = vsyncpa [#allocation6], 0
    %10 = vsyncpa [#allocation4], 0
    // Predicated region
    $region2: #{tpu_custom_call.1} parent=1 // pred_check
      _
    $region3: #{tpu_custom_call.1} parent=1 // pred_check_branch
      %12 = sbr.rel (0) target = $region5
    $region4: #{tpu_custom_call.1} parent=1 // pred_region
      %s14 = ssub.s32 64, 64
      %15 = vsyncadd [#allocation3], %s14
      %s17 = sshll.u32 [#allocation2], 4
      %s18 = int_to_ptr.vmem [resolvable:$true] %s17
      %20 = dma.hbm_to_vmem [thread:$0]  %s0, 64, %s18, [#allocation3]
    $region5: #{tpu_custom_call.1} parent=1 // pred_fallthru
      _
    // Predicated region
    $region6: #{tpu_custom_call.1} parent=1 // pred_check
      _
    $region7: #{tpu_custom_call.1} parent=1 // pred_check_branch
      %22 = sbr.rel (0) target = $region9
    $region8: #{tpu_custom_call.1} parent=1 // pred_region
      %s24 = ssub.s32 2048, 2048
      %25 = vsyncadd [#allocation6], %s24
      %s26 = sshll.u32 [#allocation5], 4
      %s27 = int_to_ptr.vmem [resolvable:$true] %s26
      %32 = dma.hbm_to_vmem [thread:$0]  %s1, 2048, %s27, [#allocation6], 128, 128, 8
    $region9: #{tpu_custom_call.1} parent=1 // pred_fallthru
      _
    // Predicated region
    $region10: #{tpu_custom_call.1} parent=1 // pred_check
      _
    $region11: #{tpu_custom_call.1} parent=1 // pred_check_branch
      %34 = sbr.rel (0) target = $region13
    $region12: #{tpu_custom_call.1} parent=1 // pred_region
      _
    $region13: #{tpu_custom_call.1} parent=1 // pred_fallthru
      _
    // Predicated region
    $region14: #{tpu_custom_call.1} parent=1 // pred_check
      _
    $region15: #{tpu_custom_call.1} parent=1 // pred_check_branch
      %36 = sbr.rel (0) target = $region17
    $region16: #{tpu_custom_call.1} parent=1 // pred_region
      %37 = dma.done [#allocation3], 64
    $region17: #{tpu_custom_call.1} parent=1 // pred_fallthru
      _
    // Predicated region
    $region18: #{tpu_custom_call.1} parent=1 // pred_check
      _
    $region19: #{tpu_custom_call.1} parent=1 // pred_check_branch
      %39 = sbr.rel (0) target = $region21
    $region20: #{tpu_custom_call.1} parent=1 // pred_region
      %40 = dma.done [#allocation6], 2048
    $region21: #{tpu_custom_call.1} parent=1 // pred_fallthru
      _
    %v41 = vld [vmem:[#allocation2] sm:$0xf]
    %v42 = vld [vmem:[#allocation5] sm:$0xff]
    %v43 = vld [vmem:[#allocation5 + $0x8] sm:$0xff]
    %v44 = vld [vmem:[#allocation5 + $0x10] sm:$0xff]
    %v45 = vld [vmem:[#allocation5 + $0x18] sm:$0xff]
    %v46 = vld [vmem:[#allocation5 + $0x20] sm:$0xff]
    %v47 = vld [vmem:[#allocation5 + $0x28] sm:$0xff]
    %v48 = vld [vmem:[#allocation5 + $0x30] sm:$0xff]
    %v49 = vld [vmem:[#allocation5 + $0x38] sm:$0xff]
    %v50 = vld [vmem:[#allocation5 + $0x40] sm:$0xff]
    %v51 = vld [vmem:[#allocation5 + $0x48] sm:$0xff]
    %v52 = vld [vmem:[#allocation5 + $0x50] sm:$0xff]
    %v53 = vld [vmem:[#allocation5 + $0x58] sm:$0xff]
    %v54 = vld [vmem:[#allocation5 + $0x60] sm:$0xff]
    %v55 = vld [vmem:[#allocation5 + $0x68] sm:$0xff]
    %v56 = vld [vmem:[#allocation5 + $0x70] sm:$0xff]
    %v57 = vld [vmem:[#allocation5 + $0x78] sm:$0xff]
    %v58 = vld [vmem:[%s2] sm:$0x1]
    %v60 = vlaneseq
    %v61 = vshrl.u32 %v60, 7
    %v62 = vsub.s32 0, %v61
    %v63 = vrot.slane %v58, %v62
    %65 = vmatprep.subr.mxu0 0.0
    %66 = vmatpush1.msra.mxu0 %v57
    %67 = vmatprep.subr.mxu0 0.0
    %68 = vmatpush1.msra.mxu0 %v56
    %69 = vmatprep.subr.mxu0 0.0
    %70 = vmatpush1.msra.mxu0 %v55
    %71 = vmatprep.subr.mxu0 0.0
    %72 = vmatpush1.msra.mxu0 %v54
    %73 = vmatprep.subr.mxu0 0.0
    %74 = vmatpush1.msra.mxu0 %v53
    %75 = vmatprep.subr.mxu0 0.0
    %76 = vmatpush1.msra.mxu0 %v52
    %77 = vmatprep.subr.mxu0 0.0
    %78 = vmatpush1.msra.mxu0 %v51
    %79 = vmatprep.subr.mxu0 0.0
    %80 = vmatpush1.msra.mxu0 %v50
    %81 = vmatprep.subr.mxu0 0.0
    %82 = vmatpush1.msra.mxu0 %v49
    %83 = vmatprep.subr.mxu0 0.0
    %84 = vmatpush1.msra.mxu0 %v48
    %85 = vmatprep.subr.mxu0 0.0
    %86 = vmatpush1.msra.mxu0 %v47
    %87 = vmatprep.subr.mxu0 0.0
    %88 = vmatpush1.msra.mxu0 %v46
    %89 = vmatprep.subr.mxu0 0.0
    %90 = vmatpush1.msra.mxu0 %v45
    %91 = vmatprep.subr.mxu0 0.0
    %92 = vmatpush1.msra.mxu0 %v44
    %93 = vmatprep.subr.mxu0 0.0
    %94 = vmatpush1.msra.mxu0 %v43
    %95 = vmatprep.subr.mxu0 0.0
    %96 = vmatpush1.msra.mxu0 %v42
    %97 = vmatprep.subr.mxu0 0.0
    %98 = vmatpush2.msra.mxu0 0.0
    %99 = vmatprep.subr.mxu0 0.0
    %100 = vmatpush2.msra.mxu0 0.0
    %101 = vmatprep.subr.mxu0 0.0
    %102 = vmatpush2.msra.mxu0 0.0
    %103 = vmatprep.subr.mxu0 0.0
    %104 = vmatpush2.msra.mxu0 0.0
    %105 = vmatprep.subr.mxu0 0.0
    %106 = vmatpush2.msra.mxu0 0.0
    %107 = vmatprep.subr.mxu0 0.0
    %108 = vmatpush2.msra.mxu0 0.0
    %109 = vmatprep.subr.mxu0 0.0
    %110 = vmatpush2.msra.mxu0 0.0
    %111 = vmatprep.subr.mxu0 0.0
    %112 = vmatpush2.msra.mxu0 0.0
    %113 = vmatprep.subr.mxu0 0.0
    %114 = vmatpush2.msra.mxu0 0.0
    %115 = vmatprep.subr.mxu0 0.0
    %116 = vmatpush2.msra.mxu0 0.0
    %117 = vmatprep.subr.mxu0 0.0
    %118 = vmatpush2.msra.mxu0 0.0
    %119 = vmatprep.subr.mxu0 0.0
    %120 = vmatpush2.msra.mxu0 0.0
    %121 = vmatprep.subr.mxu0 0.0
    %122 = vmatpush2.msra.mxu0 0.0
    %123 = vmatprep.subr.mxu0 0.0
    %124 = vmatpush2.msra.mxu0 0.0
    %125 = vmatprep.subr.mxu0 0.0
    %126 = vmatpush2.msra.mxu0 0.0
    %127 = vmatprep.subr.mxu0 0.0
    %128 = vmatpush2.msra.mxu0 0.0
    %129 = vmatprep.mubr.f32.mxu0 0.0
    %130 = vmatmul.mubr.f32.gmra.mxu0 %v41
    %v131 = vpop.f32.mrf.mxu0
    %v132 = vadd.f32 %v63, %v131
    %v133 = vpop.f32.mrf.mxu0
    %134 = vdwg.mxu0
    %v135 = vmax.f32 %v132, 0.0
    %136 = vst [vmem:[#allocation7] sm:$0xf] %v135
    // Predicated region
    $region22: #{tpu_custom_call.1} parent=1 // pred_check
      _
    $region23: #{tpu_custom_call.1} parent=1 // pred_check_branch
      %138 = sbr.rel (0) target = $region25
    $region24: #{tpu_custom_call.1} parent=1 // pred_region
      %s140 = ssub.s32 64, 64
      %141 = vsyncadd [#allocation4], %s140
      %s143 = sshll.u32 [#allocation7], 4
      %s144 = int_to_ptr.vmem [resolvable:$true] %s143
      %146 = dma.vmem_to_hbm [thread:$0]  %s144, 64, %s3, [#allocation4]
    $region25: #{tpu_custom_call.1} parent=1 // pred_fallthru
      _
    // Predicated region
    $region26: #{tpu_custom_call.1} parent=1 // pred_check
      _
    $region27: #{tpu_custom_call.1} parent=1 // pred_check_branch
      %148 = sbr.rel (0) target = $region29
    $region28: #{tpu_custom_call.1} parent=1 // pred_region
      %149 = dma.done [#allocation4], 64
    $region29: #{tpu_custom_call.1} parent=1 // pred_fallthru
      _
    %150 = vsyncpa [#allocation3], 1
    %151 = vsyncpa [#allocation6], 1
    %152 = vsyncpa [#allocation4], 1

</llo_original>
